<compile_context>
chip_gen: v6e
topology: v6e:2x2x1
jax: 0.10.0
libtpu: 0.0.40
codegen_flags: <defaults>
</compile_context>

<pallas_src>
import functools
import math

import jax
import jax.numpy as jnp
from jax import lax
from jax.experimental import pallas as pl
from jax.experimental.pallas import tpu as pltpu


# ---------------------------------------------------------------------------
# Kernel 1: hoisted K/V projection -> head-major (B, H, S, Dh), compute_dtype.
# grid = (batch, seq-tile, head); head is innermost so the (ts, E) K/V tiles keep the same
# block index across consecutive head steps and are only DMA'd once per (batch, seq-tile).
# ---------------------------------------------------------------------------
def _kv_proj_kernel(k_ref, v_ref, wk_ref, wv_ref, kp_ref, vp_ref):
    kp_ref[...] = jnp.dot(k_ref[...], wk_ref[...],
                          preferred_element_type=jnp.float32).astype(kp_ref.dtype)
    vp_ref[...] = jnp.dot(v_ref[...], wv_ref[...],
                          preferred_element_type=jnp.float32).astype(vp_ref.dtype)


def _project_kv(k, v, wk_h, wv_h, *, ts, compute_dtype, vmem_limit_bytes):
    B, S, E = k.shape
    H, _, Dh = wk_h.shape
    grid = (B, S // ts, H)
    return pl.pallas_call(
        _kv_proj_kernel,
        out_shape=(jax.ShapeDtypeStruct((B, H, S, Dh), compute_dtype),
                   jax.ShapeDtypeStruct((B, H, S, Dh), compute_dtype)),
        grid_spec=pltpu.PrefetchScalarGridSpec(
            num_scalar_prefetch=0,
            grid=grid,
            in_specs=[
                pl.BlockSpec((None, ts, E), lambda b, s, h: (b, s, 0)),   # k seq tile
                pl.BlockSpec((None, ts, E), lambda b, s, h: (b, s, 0)),   # v seq tile
                pl.BlockSpec((None, E, Dh), lambda b, s, h: (h, 0, 0)),   # Wk head block
                pl.BlockSpec((None, E, Dh), lambda b, s, h: (h, 0, 0)),   # Wv head block
            ],
            out_specs=[
                pl.BlockSpec((None, None, ts, Dh), lambda b, s, h: (b, h, s, 0)),
                pl.BlockSpec((None, None, ts, Dh), lambda b, s, h: (b, h, s, 0)),
            ]),
        compiler_params=pltpu.CompilerParams(
            dimension_semantics=("parallel", "parallel", "arbitrary"),
            vmem_limit_bytes=int(vmem_limit_bytes)),
    )(k, v, wk_h, wv_h)


# ---------------------------------------------------------------------------
# Kernel 2: flash attention with fused Q projection (init) and output projection (finalize).
# ---------------------------------------------------------------------------
def _flash_attn_kernel(q_ref, kp_ref, vp_ref, wq_ref, wo_ref, pad_ref,
                       out_ref,
                       q_scr, acc_scr, m_scr, l_scr,
                       *, num_heads, head_dim, embed_dim, tq, tk, causal,
                       compute_dtype, approx_recip):
    qi = pl.program_id(1)        # query-tile index
    ki = pl.program_id(2)        # kv-tile index (innermost reduction axis)

    # NOTE: the module scales by 1/sqrt(embed_dim) (not 1/sqrt(head_dim)); keep its semantics.
    scale = 1.0 / math.sqrt(embed_dim)

    # ---- per-(batch, q-tile) init: project Q once (full-E-wide matmul), reset state ----
    @pl.when(ki == 0)
    def _init():
        qp = jnp.dot(q_ref[...], wq_ref[...],
                     preferred_element_type=jnp.float32) * scale          # (tq, E)
        # Static head loop here is fine: runs once per q-tile, static column slices only.
        for h in range(num_heads):
            lo = h * head_dim
            q_scr[h] = qp[:, lo:lo + head_dim].astype(compute_dtype)      # head-major cache
        acc_scr[...] = jnp.zeros_like(acc_scr)
        # finite "-inf" so degenerate fully-masked rows stay NaN-free
        m_scr[...] = jnp.full_like(m_scr, -1e30)
        l_scr[...] = jnp.zeros_like(l_scr)

    # ---- per kv tile: mask built once, then fori_loop over heads (bounded live ranges) ----
    def _attend():
        pad_bad = pad_ref[...] > 0.0                                       # (1, tk)
        if causal:
            row = lax.broadcasted_iota(jnp.int32, (tq, tk), 0) + qi * tq
            col = lax.broadcasted_iota(jnp.int32, (tq, tk), 1) + ki * tk
            masked = jnp.logical_or(col > row, pad_bad)                    # (tq, tk)
        else:
            masked = pad_bad                                               # broadcasts over rows

        def head_body(h, carry):
            qh = q_scr[h]                                                  # (tq, Dh), pre-scaled
            kh = kp_ref[h]                                                 # (tk, Dh)
            vh = vp_ref[h]                                                 # (tk, Dh)
            # contract last dim of BOTH operands -> no kh.T / XLU transpose
            s = lax.dot_general(qh, kh, (((1,), (1,)), ((), ())),
                                preferred_element_type=jnp.float32)        # (tq, tk)
            s = jnp.where(masked, -1e20, s)                                # masked_fill(-1e20)
            m_prev = m_scr[h]
            m_new = jnp.maximum(m_prev, jnp.max(s, axis=-1, keepdims=True))
            alpha = jnp.exp(m_prev - m_new)
            p = jnp.exp(s - m_new)                                         # f32 softmax numerator
            l_scr[h] = alpha * l_scr[h] + jnp.sum(p, axis=-1, keepdims=True)
            acc_scr[h] = alpha * acc_scr[h] + jnp.dot(
                p.astype(compute_dtype), vh, preferred_element_type=jnp.float32)
            m_scr[h] = m_new
            return carry

        lax.fori_loop(0, num_heads, head_body, 0)

    if causal:
        # Skip kv tiles that are entirely above the diagonal for this q-tile (~2x less work).
        pl.when(ki * tk <= qi * tq + (tq - 1))(_attend)
    else:
        _attend()

    # ---- finalize: normalize per head and accumulate the output projection head-by-head ----
    @pl.when(ki == pl.num_programs(2) - 1)
    def _finalize():
        out_acc = jnp.zeros((tq, embed_dim), jnp.float32)
        for h in range(num_heads):       # once per q-tile; static Wo row slices
            lo = h * head_dim
            if approx_recip:
                ctx = acc_scr[h] * pl.reciprocal(l_scr[h], approx=True)    # EUP slot
            else:
                ctx = acc_scr[h] / l_scr[h]                                # exact (f32 path)
            out_acc = out_acc + jnp.dot(ctx.astype(compute_dtype),
                                        wo_ref[lo:lo + head_dim, :],
                                        preferred_element_type=jnp.float32)
        out_ref[...] = out_acc.astype(out_ref.dtype)


def _derive_vmem_limit(E, Dh, H, tq, tk, compute_dtype):
    """Rough VMEM footprint estimate, clamped so the default fits v7x (64 MiB physical)."""
    bpe = jnp.dtype(compute_dtype).itemsize
    weights = 2 * 2 * E * E * bpe                         # Wq + Wo, double-buffered
    tiles = 2 * (tq * E * bpe + 2 * H * tk * Dh * bpe)    # q + (kp, vp) tiles, double-buffered
    out_tile = 2 * tq * E * 4
    scratch = H * tq * Dh * (bpe + 4) + 2 * H * tq * 4
    est = weights + tiles + out_tile + scratch
    # v5e / v6e have 128 MiB VMEM; pass vmem_limit_bytes explicitly (~96 MiB) there to
    # unlock bigger kv tiles / deeper buffering.
    return int(min(max(2 * est, 32 * 1024 * 1024), 48 * 1024 * 1024))


def multi_head_attention(q, k, v, wq, wk, wv, wo, pad_mask, *,
                         num_heads, causal=True,
                         compute_dtype=jnp.bfloat16,      # production default (MXU peak rate)
                         out_dtype=jnp.float32,
                         q_tile=None, kv_tile=None, proj_tile=None,
                         approx_reciprocal=None,
                         vmem_limit_bytes=None):
    """Fused MHA forward (eval mode). Returns (B, S, E) in out_dtype."""
    B, S, E = q.shape
    assert E % num_heads == 0, "embed_dim must be divisible by num_heads"
    Dh = E // num_heads

    tq = q_tile if q_tile is not None else min(S, 256)
    tk = kv_tile if kv_tile is not None else min(S, 512)
    ts = proj_tile if proj_tile is not None else min(S, 512)
    assert S % tq == 0 and S % tk == 0 and S % ts == 0, \
        "seq_len must be divisible by the tile sizes"  # TODO(synk): ragged tiles

    cd = compute_dtype
    if approx_reciprocal is None:
        approx_reciprocal = jnp.dtype(cd) != jnp.dtype(jnp.float32)

    q, k, v = q.astype(cd), k.astype(cd), v.astype(cd)
    wq_c, wo_c = wq.astype(cd), wo.astype(cd)
    # Head-blocked projection weights: (H, E, Dh) with [h] == W[:, h*Dh:(h+1)*Dh].
    wk_h = wk.astype(cd).reshape(E, num_heads, Dh).transpose(1, 0, 2)
    wv_h = wv.astype(cd).reshape(E, num_heads, Dh).transpose(1, 0, 2)
    pad3 = pad_mask.astype(jnp.float32).reshape(B, 1, S)   # (B,1,S): layout-robust block shape

    if vmem_limit_bytes is None:
        vmem_limit_bytes = _derive_vmem_limit(E, Dh, num_heads, tq, tk, cd)

    # --- hoisted K/V projection (each kv position projected exactly once per batch) ---
    kp, vp = _project_kv(k, v, wk_h, wv_h, ts=ts, compute_dtype=cd,
                         vmem_limit_bytes=vmem_limit_bytes)

    kernel = functools.partial(
        _flash_attn_kernel, num_heads=num_heads, head_dim=Dh, embed_dim=E,
        tq=tq, tk=tk, causal=causal, compute_dtype=cd, approx_recip=approx_reciprocal)

    grid = (B, S // tq, S // tk)
    return pl.pallas_call(
        kernel,
        out_shape=jax.ShapeDtypeStruct((B, S, E), out_dtype),
        grid_spec=pltpu.PrefetchScalarGridSpec(
            num_scalar_prefetch=0,
            grid=grid,
            in_specs=[
                pl.BlockSpec((None, tq, E), lambda b, i, j: (b, i, 0)),                 # q tile
                pl.BlockSpec((None, num_heads, tk, Dh), lambda b, i, j: (b, 0, j, 0)),  # kp tile
                pl.BlockSpec((None, num_heads, tk, Dh), lambda b, i, j: (b, 0, j, 0)),  # vp tile
                pl.BlockSpec((E, E), lambda b, i, j: (0, 0)),                           # Wq
                pl.BlockSpec((E, E), lambda b, i, j: (0, 0)),                           # Wo
                pl.BlockSpec((None, 1, tk), lambda b, i, j: (b, 0, j)),                 # pad row
            ],
            # Output block is lane-dense whenever E is a multiple of 128 (real models).
            out_specs=pl.BlockSpec((None, tq, E), lambda b, i, j: (b, i, 0)),
            scratch_shapes=[
                pltpu.VMEM((num_heads, tq, Dh), cd),            # cached pre-scaled Q, head-major
                pltpu.VMEM((num_heads, tq, Dh), jnp.float32),   # per-head accumulator
                pltpu.VMEM((num_heads, tq, 1), jnp.float32),    # running max per head
                pltpu.VMEM((num_heads, tq, 1), jnp.float32),    # running sum per head
            ]),
        compiler_params=pltpu.CompilerParams(
            dimension_semantics=("parallel", "parallel", "arbitrary"),
            vmem_limit_bytes=int(vmem_limit_bytes)),
    )(q, kp, vp, wq_c, wo_c, pad3)


def _reference(q, k, v, wq, wk, wv, wo, pad_mask, causal_mask, *, num_heads):
    """Pure-JAX re-implementation of the PyTorch forward (eval mode)."""
    B, S, E = q.shape
    Dh = E // num_heads

    def split(x):
        return x.reshape(B, S, num_heads, Dh).transpose(0, 2, 1, 3)   # (B, H, S, Dh)

    qp, kp, vp = q @ wq, k @ wk, v @ wv
    qh, kh, vh = split(qp), split(kp), split(vp)

    score = jnp.einsum('bhqd,bhkd->bhqk', qh, kh) / math.sqrt(E)
    score = jnp.where(causal_mask[None, None, :, :] > 0.0, -1e20, score)
    score = jnp.where(pad_mask[:, None, None, :] > 0.0, -1e20, score)
    attn = jax.nn.softmax(score, axis=-1)
    out = jnp.einsum('bhqk,bhkd->bhqd', attn, vh)
    out = out.transpose(0, 2, 1, 3).reshape(B, S, E)
    return out @ wo


if __name__ == "__main__":
    B, S, E, H = 2, 8, 32, 4

    key = jax.random.PRNGKey(0)
    kq, kk, kv, kwq, kwk, kwv, kwo = jax.random.split(key, 7)

    q = jax.random.normal(kq, (B, S, E), dtype=jnp.float32)
    k = jax.random.normal(kk, (B, S, E), dtype=jnp.float32)
    v = jax.random.normal(kv, (B, S, E), dtype=jnp.float32)

    # "Linear" weights (bias=False), stored as (in, out) so y = x @ W.
    lim = 1.0 / math.sqrt(E)
    wq = jax.random.uniform(kwq, (E, E), jnp.float32, -lim, lim)
    wk = jax.random.uniform(kwk, (E, E), jnp.float32, -lim, lim)
    wv = jax.random.uniform(kwv, (E, E), jnp.float32, -lim, lim)
    wo = jax.random.uniform(kwo, (E, E), jnp.float32, -lim, lim)

    # Standard causal mask (only used by the reference; the kernel builds it from iota).
    causal_mask = jnp.triu(jnp.ones((S, S), jnp.float32), k=1)
    # Pad mask: last two positions of batch 1 are padding.
    pad_mask = jnp.zeros((B, S), jnp.float32).at[1, S - 2:].set(1.0)

    ref = _reference(q, k, v, wq, wk, wv, wo, pad_mask, causal_mask, num_heads=H)

    # f32 path (tight check; exact reciprocal in this mode).
    out = multi_head_attention(q, k, v, wq, wk, wv, wo, pad_mask,
                               num_heads=H, causal=True,
                               compute_dtype=jnp.float32)
    out = jax.block_until_ready(out)
    assert out.shape == (B, S, E)
    assert jnp.allclose(out, ref, atol=2e-3, rtol=2e-3), "f32 kernel mismatch vs reference"

    # bf16 MXU path (production default); looser tolerance for bf16 rounding.
    out_bf16 = multi_head_attention(q, k, v, wq, wk, wv, wo, pad_mask,
                                    num_heads=H, causal=True,
                                    compute_dtype=jnp.bfloat16)
    out_bf16 = jax.block_until_ready(out_bf16)
    assert out_bf16.shape == (B, S, E)
    assert jnp.allclose(out_bf16, ref, atol=0.15, rtol=0.15), "bf16 kernel mismatch vs reference"

    print("KERNEL_OK")
</pallas_src>

<mosaic_0001>
module attributes {stable_mosaic.version = 11 : i64} {
  func.func @_kv_proj_kernel(%arg0: i32, %arg1: i32, %arg2: i32, %arg3: memref<1x8x32xf32, #tpu.memory_space<vmem>>, %arg4: memref<1x8x32xf32, #tpu.memory_space<vmem>>, %arg5: memref<1x32x8xf32, #tpu.memory_space<vmem>>, %arg6: memref<1x32x8xf32, #tpu.memory_space<vmem>>, %arg7: memref<1x1x8x8xf32, #tpu.memory_space<vmem>>, %arg8: memref<1x1x8x8xf32, #tpu.memory_space<vmem>>) attributes {dimension_semantics = [#tpu.dimension_semantics<parallel>, #tpu.dimension_semantics<parallel>, #tpu.dimension_semantics<arbitrary>], iteration_bounds = array<i64: 2, 1, 4>, scalar_prefetch = 0 : i64, scratch_operands = 0 : i64, tpu.core_type = #tpu.core_type<tc>, window_params = [{transform_indices = @transform_0, window_bounds = array<i64: 1, 8, 32>}, {transform_indices = @transform_1, window_bounds = array<i64: 1, 8, 32>}, {transform_indices = @transform_2, window_bounds = array<i64: 1, 32, 8>}, {transform_indices = @transform_3, window_bounds = array<i64: 1, 32, 8>}, {transform_indices = @transform_4, window_bounds = array<i64: 1, 1, 8, 8>}, {transform_indices = @transform_5, window_bounds = array<i64: 1, 1, 8, 8>}]} {
    %c0 = arith.constant 0 : index
    %c0_0 = arith.constant 0 : index
    %c0_1 = arith.constant 0 : index
    %0 = vector.load %arg3[%c0, %c0_0, %c0_1] : memref<1x8x32xf32, #tpu.memory_space<vmem>>, vector<1x8x32xf32>
    %1 = vector.shape_cast %0 : vector<1x8x32xf32> to vector<8x32xf32>
    %c0_2 = arith.constant 0 : index
    %c0_3 = arith.constant 0 : index
    %c0_4 = arith.constant 0 : index
    %2 = vector.load %arg5[%c0_2, %c0_3, %c0_4] : memref<1x32x8xf32, #tpu.memory_space<vmem>>, vector<1x32x8xf32>
    %3 = vector.shape_cast %2 : vector<1x32x8xf32> to vector<32x8xf32>
    %cst = arith.constant dense<0.000000e+00> : vector<8x8xf32>
    %4 = tpu.matmul %1, %3, %cst {dimension_numbers = #tpu.dot_dimension_numbers<[1], [0], [0], [1], [0, 0, 1, 1], [], []>} : vector<8x32xf32>, vector<32x8xf32>, vector<8x8xf32> -> vector<8x8xf32>
    %c0_5 = arith.constant 0 : index
    %c0_6 = arith.constant 0 : index
    %c0_7 = arith.constant 0 : index
    %c0_8 = arith.constant 0 : index
    %5 = vector.load %arg7[%c0_5, %c0_6, %c0_7, %c0_8] : memref<1x1x8x8xf32, #tpu.memory_space<vmem>>, vector<1x1x8x8xf32>
    %6 = vector.shape_cast %5 : vector<1x1x8x8xf32> to vector<8x8xf32>
    %7 = vector.shape_cast %4 : vector<8x8xf32> to vector<1x1x8x8xf32>
    tpu.vector_store %arg7[%c0_5, %c0_6, %c0_7, %c0_8], %7 {strides = array<i32>} : memref<1x1x8x8xf32, #tpu.memory_space<vmem>>, vector<1x1x8x8xf32>,
    %c0_9 = arith.constant 0 : index
    %c0_10 = arith.constant 0 : index
    %c0_11 = arith.constant 0 : index
    %8 = vector.load %arg4[%c0_9, %c0_10, %c0_11] : memref<1x8x32xf32, #tpu.memory_space<vmem>>, vector<1x8x32xf32>
    %9 = vector.shape_cast %8 : vector<1x8x32xf32> to vector<8x32xf32>
    %c0_12 = arith.constant 0 : index
    %c0_13 = arith.constant 0 : index
    %c0_14 = arith.constant 0 : index
    %10 = vector.load %arg6[%c0_12, %c0_13, %c0_14] : memref<1x32x8xf32, #tpu.memory_space<vmem>>, vector<1x32x8xf32>
    %11 = vector.shape_cast %10 : vector<1x32x8xf32> to vector<32x8xf32>
    %cst_15 = arith.constant dense<0.000000e+00> : vector<8x8xf32>
    %12 = tpu.matmul %9, %11, %cst_15 {dimension_numbers = #tpu.dot_dimension_numbers<[1], [0], [0], [1], [0, 0, 1, 1], [], []>} : vector<8x32xf32>, vector<32x8xf32>, vector<8x8xf32> -> vector<8x8xf32>
    %c0_16 = arith.constant 0 : index
    %c0_17 = arith.constant 0 : index
    %c0_18 = arith.constant 0 : index
    %c0_19 = arith.constant 0 : index
    %13 = vector.load %arg8[%c0_16, %c0_17, %c0_18, %c0_19] : memref<1x1x8x8xf32, #tpu.memory_space<vmem>>, vector<1x1x8x8xf32>
    %14 = vector.shape_cast %13 : vector<1x1x8x8xf32> to vector<8x8xf32>
    %15 = vector.shape_cast %12 : vector<8x8xf32> to vector<1x1x8x8xf32>
    tpu.vector_store %arg8[%c0_16, %c0_17, %c0_18, %c0_19], %15 {strides = array<i32>} : memref<1x1x8x8xf32, #tpu.memory_space<vmem>>, vector<1x1x8x8xf32>,
    return
  }
  func.func @transform_0(%arg0: i32, %arg1: i32, %arg2: i32) -> (i32, i32, i32) {
    %c0_i32 = arith.constant 0 : i32
    %c0_i32_0 = arith.constant 0 : i32
    return %arg0, %arg1, %c0_i32 : i32, i32, i32
  }
  func.func @transform_1(%arg0: i32, %arg1: i32, %arg2: i32) -> (i32, i32, i32) {
    %c0_i32 = arith.constant 0 : i32
    %c0_i32_0 = arith.constant 0 : i32
    return %arg0, %arg1, %c0_i32 : i32, i32, i32
  }
  func.func @transform_2(%arg0: i32, %arg1: i32, %arg2: i32) -> (i32, i32, i32) {
    %c0_i32 = arith.constant 0 : i32
    %c0_i32_0 = arith.constant 0 : i32
    %c0_i32_1 = arith.constant 0 : i32
    return %arg2, %c0_i32, %c0_i32_0 : i32, i32, i32
  }
  func.func @transform_3(%arg0: i32, %arg1: i32, %arg2: i32) -> (i32, i32, i32) {
    %c0_i32 = arith.constant 0 : i32
    %c0_i32_0 = arith.constant 0 : i32
    %c0_i32_1 = arith.constant 0 : i32
    return %arg2, %c0_i32, %c0_i32_0 : i32, i32, i32
  }
  func.func @transform_4(%arg0: i32, %arg1: i32, %arg2: i32) -> (i32, i32, i32, i32) {
    %c0_i32 = arith.constant 0 : i32
    %c0_i32_0 = arith.constant 0 : i32
    return %arg0, %arg2, %arg1, %c0_i32 : i32, i32, i32, i32
  }
  func.func @transform_5(%arg0: i32, %arg1: i32, %arg2: i32) -> (i32, i32, i32, i32) {
    %c0_i32 = arith.constant 0 : i32
    %c0_i32_0 = arith.constant 0 : i32
    return %arg0, %arg2, %arg1, %c0_i32 : i32, i32, i32, i32
  }
}

</mosaic_0001>

<llo_original>
// kernel: tpu_custom_call.1
$region0: #{tpu_custom_call.1}
  #allocation0 [shape = 'u32[]', space=smem, size = 0x4, offset = 0x4, fixed_abs, tag = 'smem constant byte address 0x4 - core index']
  #allocation1 [shape = 'u32[144,128]{1,0:T(1,128)}', space=vmem, size = 0x12000, scoped, tag = 'internal scratch']
  %s0 = inlined_call_operand.vmem [shape: f32[2,8,32], index: 0, kind: input, shape index: {}]
  %s1 = inlined_call_operand.vmem [shape: f32[2,8,32], index: 1, kind: input, shape index: {}]
  %s2 = inlined_call_operand.vmem [shape: f32[4,32,8], index: 2, kind: input, shape index: {}]
  %s3 = inlined_call_operand.vmem [shape: f32[4,32,8], index: 3, kind: input, shape index: {}]
  %s4 = inlined_call_operand.hbm [shape: f32[2,4,8,8], index: 4, kind: output, shape index: {0}]
  %s5 = inlined_call_operand.hbm [shape: f32[2,4,8,8], index: 5, kind: output, shape index: {1}]
  %6 = xla_tuple %s4, %s5
  %s7 = sld [smem:[#allocation0]]
  $region57: #{tpu_custom_call.1} parent=0
    _
  %s9 = ssub.s32 1, %s7
  %s10 = scalar_select 0, %s9, %s7
  $region1: #{tpu_custom_call.1} parent=0
    #allocation2 [shape = 'u8[8192]{0}', space=vmem, size = 0x2000, scoped, tag = 'output window, operand 0']
    #allocation3 [shape = 's32[2]{0}', space=sflag, size = 0x8, scoped, tag = 'scoped memory for tpu_custom_call.1']
    #allocation4 [shape = 'u8[8192]{0}', space=vmem, size = 0x2000, scoped, tag = 'output window, operand 1']
    #allocation5 [shape = 's32[2]{0}', space=sflag, size = 0x8, scoped, tag = 'scoped memory for tpu_custom_call.1']
    %11 = vsyncpa [#allocation3], 0
    %s12 = scalar_lea.sflag [#allocation3], 1
    %13 = vsyncpa %s12, 0
    %14 = vsyncpa [#allocation5], 0
    %s15 = scalar_lea.sflag [#allocation5], 1
    %16 = vsyncpa %s15, 0
    loop: start=0, step=1, limit=10
    $region2: #{tpu_custom_call.1} parent=1 // loop_pre_header
      _
    $region3: #{tpu_custom_call.1} parent=1 // loop_header
      %s18 = sphi 0, %s22
      %p19 = scmp.ge.s32.totalorder %s18, 10
      %s25 = sphi 0, %s44
      %s26 = sphi 0, %s40
      %s27 = sphi 0, %s36
      %s28 = sphi 0, %s25
      %s29 = sphi 0, %s26
      %s30 = sphi 0, %s27
      %s31 = sphi 0, %s28
      %s32 = sphi 0, %s29
      %s33 = sphi 0, %s30
      %s49 = sphi 0, %s51
      %s52 = sphi 0, %s49
      %s53 = sphi 0, %s52
      %s69 = sphi 0, %s53
      %s77 = sphi 0, %s79
      %s80 = sphi 0, %s77
      %s81 = sphi 0, %s80
      %s97 = sphi 0, %s81
      %s103 = sphi 0, %s105
      %s106 = sphi 0, %s103
      %s107 = sphi 0, %s106
      %s123 = sphi 0, %s107
      %s129 = sphi 0, %s131
      %s132 = sphi 0, %s129
      %s133 = sphi 0, %s132
      %s149 = sphi 0, %s133
      %s159 = sphi 0, %s161
      %s162 = sphi 0, %s159
      %s163 = sphi 0, %s162
      %s179 = sphi 0, %s163
      %s189 = sphi 0, %s191
      %s192 = sphi 0, %s189
      %s193 = sphi 0, %s192
      %s209 = sphi 0, %s193
    $region4: #{tpu_custom_call.1} parent=1 // loop_header_branch
      %21 = sbr.rel (%p19) target = $region8
    $region5: #{tpu_custom_call.1} parent=1 // loop_body
      %s23 = ssub.s32 %s18, 1
      %s24 = ssub.s32 %s18, 2
      %s34 = sadd.s32 1, %s27
      %p35 = scmp.ge.s32.totalorder %s34, 4
      %s36 = scalar_select %p35, 0, %s34
      %s37 = sadd.s32 1, %s26
      %s38 = scalar_select %p35, %s37, %s26
      %p39 = scmp.ge.s32.totalorder %s38, 1
      %s40 = scalar_select %p39, 0, %s38
      %s41 = sadd.s32 1, %s25
      %s42 = scalar_select %p39, %s41, %s25
      %p43 = scmp.ge.s32.totalorder %s42, 2
      %s44 = scalar_select %p43, 0, %s42
      %s45 = ssub.s32 %s25, %s44
      %s46 = ssub.s32 %s26, %s40
      %s47 = sor.u32 %s45, %s46
      %p48 = scmp.eq.s32.totalorder %s47, 0
      %s50 = sadd.s32 %s49, 1
      %s51 = scalar_select %p48, %s49, %s50
      %p54 = pneg %p48
      %p55 = scmp.eq.s32.totalorder %s18, 7
      %p56 = por %p54, %p55
      %p57 = scmp.ne.s32.totalorder %s49, %s52
      %p58 = scmp.eq.s32.totalorder %s18, 0
      %p59 = por %p57, %p58
      %p60 = scmp.ne.s32.totalorder %s49, %s52
      %p61 = scmp.eq.s32.totalorder %s23, 7
      %p62 = por %p60, %p61
      %p63 = scmp.ne.s32.totalorder %s52, %s53
      %p64 = scmp.eq.s32.totalorder %s23, 0
      %p65 = por %p63, %p64
      %p66 = scmp.ne.s32.totalorder %s52, %s53
      %p67 = scmp.eq.s32.totalorder %s24, 7
      %p68 = por %p66, %p67
      %p70 = scmp.ne.s32.totalorder %s53, %s69
      %p71 = scmp.eq.s32.totalorder %s24, 0
      %p72 = por %p70, %p71
      %s73 = ssub.s32 %s25, %s44
      %s74 = ssub.s32 %s26, %s40
      %s75 = sor.u32 %s73, %s74
      %p76 = scmp.eq.s32.totalorder %s75, 0
      %s78 = sadd.s32 %s77, 1
      %s79 = scalar_select %p76, %s77, %s78
      %p82 = pneg %p76
      %p83 = scmp.eq.s32.totalorder %s18, 7
      %p84 = por %p82, %p83
      %p85 = scmp.ne.s32.totalorder %s77, %s80
      %p86 = scmp.eq.s32.totalorder %s18, 0
      %p87 = por %p85, %p86
      %p88 = scmp.ne.s32.totalorder %s77, %s80
      %p89 = scmp.eq.s32.totalorder %s23, 7
      %p90 = por %p88, %p89
      %p91 = scmp.ne.s32.totalorder %s80, %s81
      %p92 = scmp.eq.s32.totalorder %s23, 0
      %p93 = por %p91, %p92
      %p94 = scmp.ne.s32.totalorder %s80, %s81
      %p95 = scmp.eq.s32.totalorder %s24, 7
      %p96 = por %p94, %p95
      %p98 = scmp.ne.s32.totalorder %s81, %s97
      %p99 = scmp.eq.s32.totalorder %s24, 0
      %p100 = por %p98, %p99
      %s101 = ssub.s32 %s27, %s36
      %p102 = scmp.eq.s32.totalorder %s101, 0
      %s104 = sadd.s32 %s103, 1
      %s105 = scalar_select %p102, %s103, %s104
      %p108 = pneg %p102
      %p109 = scmp.eq.s32.totalorder %s18, 7
      %p110 = por %p108, %p109
      %p111 = scmp.ne.s32.totalorder %s103, %s106
      %p112 = scmp.eq.s32.totalorder %s18, 0
      %p113 = por %p111, %p112
      %p114 = scmp.ne.s32.totalorder %s103, %s106
      %p115 = scmp.eq.s32.totalorder %s23, 7
      %p116 = por %p114, %p115
      %p117 = scmp.ne.s32.totalorder %s106, %s107
      %p118 = scmp.eq.s32.totalorder %s23, 0
      %p119 = por %p117, %p118
      %p120 = scmp.ne.s32.totalorder %s106, %s107
      %p121 = scmp.eq.s32.totalorder %s24, 7
      %p122 = por %p120, %p121
      %p124 = scmp.ne.s32.totalorder %s107, %s123
      %p125 = scmp.eq.s32.totalorder %s24, 0
      %p126 = por %p124, %p125
      %s127 = ssub.s32 %s27, %s36
      %p128 = scmp.eq.s32.totalorder %s127, 0
      %s130 = sadd.s32 %s129, 1
      %s131 = scalar_select %p128, %s129, %s130
      %p134 = pneg %p128
      %p135 = scmp.eq.s32.totalorder %s18, 7
      %p136 = por %p134, %p135
      %p137 = scmp.ne.s32.totalorder %s129, %s132
      %p138 = scmp.eq.s32.totalorder %s18, 0
      %p139 = por %p137, %p138
      %p140 = scmp.ne.s32.totalorder %s129, %s132
      %p141 = scmp.eq.s32.totalorder %s23, 7
      %p142 = por %p140, %p141
      %p143 = scmp.ne.s32.totalorder %s132, %s133
      %p144 = scmp.eq.s32.totalorder %s23, 0
      %p145 = por %p143, %p144
      %p146 = scmp.ne.s32.totalorder %s132, %s133
      %p147 = scmp.eq.s32.totalorder %s24, 7
      %p148 = por %p146, %p147
      %p150 = scmp.ne.s32.totalorder %s133, %s149
      %p151 = scmp.eq.s32.totalorder %s24, 0
      %p152 = por %p150, %p151
      %s153 = ssub.s32 %s25, %s44
      %s154 = ssub.s32 %s27, %s36
      %s155 = sor.u32 %s153, %s154
      %s156 = ssub.s32 %s26, %s40
      %s157 = sor.u32 %s155, %s156
      %p158 = scmp.eq.s32.totalorder %s157, 0
      %s160 = sadd.s32 %s159, 1
      %s161 = scalar_select %p158, %s159, %s160
      %p164 = pneg %p158
      %p165 = scmp.eq.s32.totalorder %s18, 7
      %p166 = por %p164, %p165
      %p167 = scmp.ne.s32.totalorder %s159, %s162
      %p168 = scmp.eq.s32.totalorder %s18, 0
      %p169 = por %p167, %p168
      %p170 = scmp.ne.s32.totalorder %s159, %s162
      %p171 = scmp.eq.s32.totalorder %s23, 7
      %p172 = por %p170, %p171
      %p173 = scmp.ne.s32.totalorder %s162, %s163
      %p174 = scmp.eq.s32.totalorder %s23, 0
      %p175 = por %p173, %p174
      %p176 = scmp.ne.s32.totalorder %s162, %s163
      %p177 = scmp.eq.s32.totalorder %s24, 7
      %p178 = por %p176, %p177
      %p180 = scmp.ne.s32.totalorder %s163, %s179
      %p181 = scmp.eq.s32.totalorder %s24, 0
      %p182 = por %p180, %p181
      %s183 = ssub.s32 %s25, %s44
      %s184 = ssub.s32 %s27, %s36
      %s185 = sor.u32 %s183, %s184
      %s186 = ssub.s32 %s26, %s40
      %s187 = sor.u32 %s185, %s186
      %p188 = scmp.eq.s32.totalorder %s187, 0
      %s190 = sadd.s32 %s189, 1
      %s191 = scalar_select %p188, %s189, %s190
      %p194 = pneg %p188
      %p195 = scmp.eq.s32.totalorder %s18, 7
      %p196 = por %p194, %p195
      %p197 = scmp.ne.s32.totalorder %s189, %s192
      %p198 = scmp.eq.s32.totalorder %s18, 0
      %p199 = por %p197, %p198
      %p200 = scmp.ne.s32.totalorder %s189, %s192
      %p201 = scmp.eq.s32.totalorder %s23, 7
      %p202 = por %p200, %p201
      %p203 = scmp.ne.s32.totalorder %s192, %s193
      %p204 = scmp.eq.s32.totalorder %s23, 0
      %p205 = por %p203, %p204
      %p206 = scmp.ne.s32.totalorder %s192, %s193
      %p207 = scmp.eq.s32.totalorder %s24, 7
      %p208 = por %p206, %p207
      %p210 = scmp.ne.s32.totalorder %s193, %s209
      %p211 = scmp.eq.s32.totalorder %s24, 0
      %p212 = por %p210, %p211
      %p213 = scmp.le.s32.totalorder 1, %s18
      %p214 = scmp.lt.s32.totalorder %s18, 9
      %p215 = pnand %p213, %p214
      %p216 = pneg %p215
      // Predicated region
      $region9: #{tpu_custom_call.1} parent=5 // pred_check
        _
      $region10: #{tpu_custom_call.1} parent=5 // pred_check_branch
        %218 = sbr.rel (%p215) target = $region12
      $region11: #{tpu_custom_call.1} parent=5 // pred_region
        %s219 = ssub.s32 %s18, 1
      $region12: #{tpu_custom_call.1} parent=5 // pred_fallthru
        _
      %p220 = scmp.lt.s32.totalorder %s18, 8
      // Predicated region
      $region13: #{tpu_custom_call.1} parent=5 // pred_check
        %p221 = pneg %p220
      $region14: #{tpu_custom_call.1} parent=5 // pred_check_branch
        %223 = sbr.rel (%p221) target = $region16
      $region15: #{tpu_custom_call.1} parent=5 // pred_region
        // Predicated region
        $region17: #{tpu_custom_call.1} parent=15 // pred_check
          %p224 = pneg %p59
        $region18: #{tpu_custom_call.1} parent=15 // pred_check_branch
          %226 = sbr.rel (%p224) target = $region20
        $region19: #{tpu_custom_call.1} parent=15 // pred_region
          %p227 = scmp.lt.s32.totalorder %s25, 1
          %s228 = scalar_select %p227, %s25, 1
          %p229 = scmp.lt.s32.totalorder %s26, 0
          %s230 = scalar_select %p229, %s26, 0
          %s231 = sadd.s32 %s230, %s228
          %s232 = smul.addr %s231, 8
          %s233 = scalar_lea.vmem %s0, %s232
        $region20: #{tpu_custom_call.1} parent=15 // pred_fallthru
          _
        // Predicated region
        $region21: #{tpu_custom_call.1} parent=15 // pred_check
          %p234 = pneg %p87
        $region22: #{tpu_custom_call.1} parent=15 // pred_check_branch
          %236 = sbr.rel (%p234) target = $region24
        $region23: #{tpu_custom_call.1} parent=15 // pred_region
          %p237 = scmp.lt.s32.totalorder %s25, 1
          %s238 = scalar_select %p237, %s25, 1
          %p239 = scmp.lt.s32.totalorder %s26, 0
          %s240 = scalar_select %p239, %s26, 0
          %s241 = sadd.s32 %s240, %s238
          %s242 = smul.addr %s241, 8
          %s243 = scalar_lea.vmem %s1, %s242
        $region24: #{tpu_custom_call.1} parent=15 // pred_fallthru
          _
        // Predicated region
        $region25: #{tpu_custom_call.1} parent=15 // pred_check
          %p244 = pneg %p113
        $region26: #{tpu_custom_call.1} parent=15 // pred_check_branch
          %246 = sbr.rel (%p244) target = $region28
        $region27: #{tpu_custom_call.1} parent=15 // pred_region
          %p247 = scmp.lt.s32.totalorder %s27, 3
          %s248 = scalar_select %p247, %s27, 3
          %s249 = smul.addr %s248, 4
          %s250 = smul.addr %s249, 8
          %s251 = scalar_lea.vmem %s2, %s250
        $region28: #{tpu_custom_call.1} parent=15 // pred_fallthru
          _
        // Predicated region
        $region29: #{tpu_custom_call.1} parent=15 // pred_check
          %p252 = pneg %p139
        $region30: #{tpu_custom_call.1} parent=15 // pred_check_branch
          %254 = sbr.rel (%p252) target = $region32
        $region31: #{tpu_custom_call.1} parent=15 // pred_region
          %p255 = scmp.lt.s32.totalorder %s27, 3
          %s256 = scalar_select %p255, %s27, 3
          %s257 = smul.addr %s256, 4
          %s258 = smul.addr %s257, 8
          %s259 = scalar_lea.vmem %s3, %s258
        $region32: #{tpu_custom_call.1} parent=15 // pred_fallthru
          _
      $region16: #{tpu_custom_call.1} parent=5 // pred_fallthru
        _
      %p260 = scmp.le.s32.totalorder 1, %s18
      %p261 = scmp.lt.s32.totalorder %s18, 9
      %p262 = pnand %p260, %p261
      %p263 = pneg %p262
      // Predicated region
      $region33: #{tpu_custom_call.1} parent=5 // pred_check
        _
      $region34: #{tpu_custom_call.1} parent=5 // pred_check_branch
        %265 = sbr.rel (%p262) target = $region36
      $region35: #{tpu_custom_call.1} parent=5 // pred_region
        %s266 = ssub.s32 %s18, 1
        %p267 = scmp.lt.s32.totalorder %s28, 1
        %s268 = scalar_select %p267, %s28, 1
        %p269 = scmp.lt.s32.totalorder %s29, 0
        %s270 = scalar_select %p269, %s29, 0
        %s271 = sadd.s32 %s270, %s268
        %s272 = smul.addr %s271, 8
        %s273 = scalar_lea.vmem %s0, %s272
        %p274 = pneg %p65
        %p275 = pneg %p62
        %p276 = scmp.lt.s32.totalorder %s28, 1
        %s277 = scalar_select %p276, %s28, 1
        %p278 = scmp.lt.s32.totalorder %s29, 0
        %s279 = scalar_select %p278, %s29, 0
        %s280 = sadd.s32 %s279, %s277
        %s281 = smul.addr %s280, 8
        %s282 = scalar_lea.vmem %s1, %s281
        %p283 = pneg %p93
        %p284 = pneg %p90
        %p285 = scmp.lt.s32.totalorder %s30, 3
        %s286 = scalar_select %p285, %s30, 3
        %s287 = smul.addr %s286, 4
        %s288 = smul.addr %s287, 8
        %s289 = scalar_lea.vmem %s2, %s288
        %p290 = pneg %p119
        %p291 = pneg %p116
        %p292 = scmp.lt.s32.totalorder %s30, 3
        %s293 = scalar_select %p292, %s30, 3
        %s294 = smul.addr %s293, 4
        %s295 = smul.addr %s294, 8
        %s296 = scalar_lea.vmem %s3, %s295
        %p297 = pneg %p145
        %p298 = pneg %p142
        %p299 = pneg %p175
        %p300 = pneg %p172
        %s301 = sand.u32 %s162, 1
        %s302 = scalar_lea.sflag [#allocation3], %s301
        %s303 = sand.u32 %s162, 1
        %s304 = smul.addr %s303, 8
        %s305 = scalar_lea.vmem [#allocation2], %s304
        %p306 = pneg %p205
        %p307 = pneg %p202
        %s308 = sand.u32 %s192, 1
        %s309 = scalar_lea.sflag [#allocation5], %s308
        %s310 = sand.u32 %s192, 1
        %s311 = smul.addr %s310, 8
        %s312 = scalar_lea.vmem [#allocation4], %s311
        %p313 = scmp.lt.s32.totalorder %s28, 1
        %s314 = scalar_select %p313, %s28, 1
        %p315 = scmp.lt.s32.totalorder %s29, 0
        %s316 = scalar_select %p315, %s29, 0
        %s317 = sadd.s32 %s316, %s314
        %s318 = smul.addr %s317, 8
        %s319 = scalar_lea.vmem %s0, %s318
        %p320 = scmp.lt.s32.totalorder %s28, 1
        %s321 = scalar_select %p320, %s28, 1
        %p322 = scmp.lt.s32.totalorder %s29, 0
        %s323 = scalar_select %p322, %s29, 0
        %s324 = sadd.s32 %s323, %s321
        %s325 = smul.addr %s324, 8
        %s326 = scalar_lea.vmem %s1, %s325
        %p327 = scmp.lt.s32.totalorder %s30, 3
        %s328 = scalar_select %p327, %s30, 3
        %s329 = smul.addr %s328, 4
        %s330 = smul.addr %s329, 8
        %s331 = scalar_lea.vmem %s2, %s330
        %p332 = scmp.lt.s32.totalorder %s30, 3
        %s333 = scalar_select %p332, %s30, 3
        %s334 = smul.addr %s333, 4
        %s335 = smul.addr %s334, 8
        %s336 = scalar_lea.vmem %s3, %s335
        %v337 = vld [vmem:[%s319] sm:$0xff]
        %v338 = vld [vmem:[%s331] sm:$0xff]
        %v339 = vld [vmem:[%s331 + $0x8] sm:$0xff]
        %v340 = vld [vmem:[%s331 + $0x10] sm:$0xff]
        %v341 = vld [vmem:[%s331 + $0x18] sm:$0xff]
        %vm342 = vcmask 261120
        %v344 = vsel %vm342, %v337, 0
        %346 = vmatprep.subr.mxu0 0.0
        %347 = vmatpush1.msra.mxu0 0.0
        %348 = vmatprep.subr.mxu0 0.0
        %349 = vmatpush1.msra.mxu0 0.0
        %350 = vmatprep.subr.mxu0 0.0
        %351 = vmatpush1.msra.mxu0 0.0
        %352 = vmatprep.subr.mxu0 0.0
        %353 = vmatpush1.msra.mxu0 0.0
        %354 = vmatprep.subr.mxu0 0.0
        %355 = vmatpush1.msra.mxu0 0.0
        %356 = vmatprep.subr.mxu0 0.0
        %357 = vmatpush1.msra.mxu0 0.0
        %358 = vmatprep.subr.mxu0 0.0
        %359 = vmatpush1.msra.mxu0 0.0
        %360 = vmatprep.subr.mxu0 0.0
        %361 = vmatpush1.msra.mxu0 0.0
        %362 = vmatprep.subr.mxu0 0.0
        %363 = vmatpush1.msra.mxu0 0.0
        %364 = vmatprep.subr.mxu0 0.0
        %365 = vmatpush1.msra.mxu0 0.0
        %366 = vmatprep.subr.mxu0 0.0
        %367 = vmatpush1.msra.mxu0 0.0
        %368 = vmatprep.subr.mxu0 0.0
        %369 = vmatpush1.msra.mxu0 0.0
        %370 = vmatprep.subr.mxu0 0.0
        %371 = vmatpush1.msra.mxu0 %v341
        %372 = vmatprep.subr.mxu0 0.0
        %373 = vmatpush1.msra.mxu0 %v340
        %374 = vmatprep.subr.mxu0 0.0
        %375 = vmatpush1.msra.mxu0 %v339
        %376 = vmatprep.subr.mxu0 0.0
        %377 = vmatpush1.msra.mxu0 %v338
        %378 = vmatprep.subr.mxu0 0.0
        %379 = vmatpush2.msra.mxu0 0.0
        %380 = vmatprep.subr.mxu0 0.0
        %381 = vmatpush2.msra.mxu0 0.0
        %382 = vmatprep.subr.mxu0 0.0
        %383 = vmatpush2.msra.mxu0 0.0
        %384 = vmatprep.subr.mxu0 0.0
        %385 = vmatpush2.msra.mxu0 0.0
        %386 = vmatprep.subr.mxu0 0.0
        %387 = vmatpush2.msra.mxu0 0.0
        %388 = vmatprep.subr.mxu0 0.0
        %389 = vmatpush2.msra.mxu0 0.0
        %390 = vmatprep.subr.mxu0 0.0
        %391 = vmatpush2.msra.mxu0 0.0
        %392 = vmatprep.subr.mxu0 0.0
        %393 = vmatpush2.msra.mxu0 0.0
        %394 = vmatprep.subr.mxu0 0.0
        %395 = vmatpush2.msra.mxu0 0.0
        %396 = vmatprep.subr.mxu0 0.0
        %397 = vmatpush2.msra.mxu0 0.0
        %398 = vmatprep.subr.mxu0 0.0
        %399 = vmatpush2.msra.mxu0 0.0
        %400 = vmatprep.subr.mxu0 0.0
        %401 = vmatpush2.msra.mxu0 0.0
        %402 = vmatprep.subr.mxu0 0.0
        %403 = vmatpush2.msra.mxu0 0.0
        %404 = vmatprep.subr.mxu0 0.0
        %405 = vmatpush2.msra.mxu0 0.0
        %406 = vmatprep.subr.mxu0 0.0
        %407 = vmatpush2.msra.mxu0 0.0
        %408 = vmatprep.subr.mxu0 0.0
        %409 = vmatpush2.msra.mxu0 0.0
        %410 = vmatprep.mubr.f32.mxu0 0.0
        %411 = vmatmul.mubr.f32.gmra.mxu0 %v344
        %v412 = vpop.f32.mrf.mxu0
        %v413 = vadd.f32 0.0, %v412
        %v414 = vpop.f32.mrf.mxu0
        %415 = vdwg.mxu0
        %vm416 = vcmask 64512
        %417 = vst.msk [vmem:[%s305] sm:$0xff] %vm416, %v413
        %v418 = vld [vmem:[%s326] sm:$0xff]
        %v419 = vld [vmem:[%s336] sm:$0xff]
        %v420 = vld [vmem:[%s336 + $0x8] sm:$0xff]
        %v421 = vld [vmem:[%s336 + $0x10] sm:$0xff]
        %v422 = vld [vmem:[%s336 + $0x18] sm:$0xff]
        %v424 = vsel %vm342, %v418, 0
        %426 = vmatprep.subr.mxu0 0.0
        %427 = vmatpush1.msra.mxu0 0.0
        %428 = vmatprep.subr.mxu0 0.0
        %429 = vmatpush1.msra.mxu0 0.0
        %430 = vmatprep.subr.mxu0 0.0
        %431 = vmatpush1.msra.mxu0 0.0
        %432 = vmatprep.subr.mxu0 0.0
        %433 = vmatpush1.msra.mxu0 0.0
        %434 = vmatprep.subr.mxu0 0.0
        %435 = vmatpush1.msra.mxu0 0.0
        %436 = vmatprep.subr.mxu0 0.0
        %437 = vmatpush1.msra.mxu0 0.0
        %438 = vmatprep.subr.mxu0 0.0
        %439 = vmatpush1.msra.mxu0 0.0
        %440 = vmatprep.subr.mxu0 0.0
        %441 = vmatpush1.msra.mxu0 0.0
        %442 = vmatprep.subr.mxu0 0.0
        %443 = vmatpush1.msra.mxu0 0.0
        %444 = vmatprep.subr.mxu0 0.0
        %445 = vmatpush1.msra.mxu0 0.0
        %446 = vmatprep.subr.mxu0 0.0
        %447 = vmatpush1.msra.mxu0 0.0
        %448 = vmatprep.subr.mxu0 0.0
        %449 = vmatpush1.msra.mxu0 0.0
        %450 = vmatprep.subr.mxu0 0.0
        %451 = vmatpush1.msra.mxu0 %v422
        %452 = vmatprep.subr.mxu0 0.0
        %453 = vmatpush1.msra.mxu0 %v421
        %454 = vmatprep.subr.mxu0 0.0
        %455 = vmatpush1.msra.mxu0 %v420
        %456 = vmatprep.subr.mxu0 0.0
        %457 = vmatpush1.msra.mxu0 %v419
        %458 = vmatprep.subr.mxu0 0.0
        %459 = vmatpush2.msra.mxu0 0.0
        %460 = vmatprep.subr.mxu0 0.0
        %461 = vmatpush2.msra.mxu0 0.0
        %462 = vmatprep.subr.mxu0 0.0
        %463 = vmatpush2.msra.mxu0 0.0
        %464 = vmatprep.subr.mxu0 0.0
        %465 = vmatpush2.msra.mxu0 0.0
        %466 = vmatprep.subr.mxu0 0.0
        %467 = vmatpush2.msra.mxu0 0.0
        %468 = vmatprep.subr.mxu0 0.0
        %469 = vmatpush2.msra.mxu0 0.0
        %470 = vmatprep.subr.mxu0 0.0
        %471 = vmatpush2.msra.mxu0 0.0
        %472 = vmatprep.subr.mxu0 0.0
        %473 = vmatpush2.msra.mxu0 0.0
        %474 = vmatprep.subr.mxu0 0.0
        %475 = vmatpush2.msra.mxu0 0.0
        %476 = vmatprep.subr.mxu0 0.0
        %477 = vmatpush2.msra.mxu0 0.0
        %478 = vmatprep.subr.mxu0 0.0
        %479 = vmatpush2.msra.mxu0 0.0
        %480 = vmatprep.subr.mxu0 0.0
        %481 = vmatpush2.msra.mxu0 0.0
        %482 = vmatprep.subr.mxu0 0.0
        %483 = vmatpush2.msra.mxu0 0.0
        %484 = vmatprep.subr.mxu0 0.0
        %485 = vmatpush2.msra.mxu0 0.0
        %486 = vmatprep.subr.mxu0 0.0
        %487 = vmatpush2.msra.mxu0 0.0
        %488 = vmatprep.subr.mxu0 0.0
        %489 = vmatpush2.msra.mxu0 0.0
        %490 = vmatprep.mubr.f32.mxu0 0.0
        %491 = vmatmul.mubr.f32.gmra.mxu0 %v424
        %v492 = vpop.f32.mrf.mxu0
        %v493 = vadd.f32 0.0, %v492
        %v494 = vpop.f32.mrf.mxu0
        %495 = vdwg.mxu0
        %496 = vst.msk [vmem:[%s312] sm:$0xff] %vm416, %v493
        %s497 = sand.u32 %s162, 1
        %s498 = scalar_lea.sflag [#allocation3], %s497
        %s499 = sand.u32 %s162, 1
        %s500 = smul.addr %s499, 8
        %s501 = scalar_lea.vmem [#allocation2], %s500
        %s502 = sand.u32 %s192, 1
        %s503 = scalar_lea.sflag [#allocation5], %s502
        %s504 = sand.u32 %s192, 1
        %s505 = smul.addr %s504, 8
        %s506 = scalar_lea.vmem [#allocation4], %s505
        // Predicated region
        $region37: #{tpu_custom_call.1} parent=35 // pred_check
          %p507 = pneg %p172
        $region38: #{tpu_custom_call.1} parent=35 // pred_check_branch
          %509 = sbr.rel (%p507) target = $region40
        $region39: #{tpu_custom_call.1} parent=35 // pred_region
          %s511 = ssub.s32 128, 128
          %512 = vsyncadd %s498, %s511
          %s513 = sadd.s32 %s29, %s30
          %s514 = smul.addr %s28, 4
          %s515 = sadd.s32 %s513, %s514
          %s516 = smul.addr %s515, 128
          %s517 = scalar_lea.hbm %s4, %s516
          %s519 = sshll.u32 %s501, 4
          %s520 = int_to_ptr.vmem [resolvable:$true] %s519
          %522 = dma.vmem_to_hbm [thread:$0]  %s520, 128, %s517, %s498
        $region40: #{tpu_custom_call.1} parent=35 // pred_fallthru
          _
        // Predicated region
        $region41: #{tpu_custom_call.1} parent=35 // pred_check
          %p523 = pneg %p202
        $region42: #{tpu_custom_call.1} parent=35 // pred_check_branch
          %525 = sbr.rel (%p523) target = $region44
        $region43: #{tpu_custom_call.1} parent=35 // pred_region
          %s527 = ssub.s32 128, 128
          %528 = vsyncadd %s503, %s527
          %s529 = sadd.s32 %s29, %s30
          %s530 = smul.addr %s28, 4
          %s531 = sadd.s32 %s529, %s530
          %s532 = smul.addr %s531, 128
          %s533 = scalar_lea.hbm %s5, %s532
          %s535 = sshll.u32 %s506, 4
          %s536 = int_to_ptr.vmem [resolvable:$true] %s535
          %538 = dma.vmem_to_hbm [thread:$0]  %s536, 128, %s533, %s503
        $region44: #{tpu_custom_call.1} parent=35 // pred_fallthru
          _
      $region36: #{tpu_custom_call.1} parent=5 // pred_fallthru
        _
      %p539 = scmp.le.s32.totalorder 2, %s18
      // Predicated region
      $region45: #{tpu_custom_call.1} parent=5 // pred_check
        %p540 = pneg %p539
      $region46: #{tpu_custom_call.1} parent=5 // pred_check_branch
        %542 = sbr.rel (%p540) target = $region48
      $region47: #{tpu_custom_call.1} parent=5 // pred_region
        %s543 = ssub.s32 %s18, 2
        // Predicated region
        $region49: #{tpu_custom_call.1} parent=47 // pred_check
          %p544 = pneg %p178
        $region50: #{tpu_custom_call.1} parent=47 // pred_check_branch
          %546 = sbr.rel (%p544) target = $region52
        $region51: #{tpu_custom_call.1} parent=47 // pred_region
          %s547 = sand.u32 %s163, 1
          %s548 = scalar_lea.sflag [#allocation3], %s547
          %s549 = sand.u32 %s163, 1
          %s550 = smul.addr %s549, 8
          %s551 = scalar_lea.vmem [#allocation2], %s550
          %552 = dma.done %s548, 128
        $region52: #{tpu_custom_call.1} parent=47 // pred_fallthru
          _
        // Predicated region
        $region53: #{tpu_custom_call.1} parent=47 // pred_check
          %p553 = pneg %p208
        $region54: #{tpu_custom_call.1} parent=47 // pred_check_branch
          %555 = sbr.rel (%p553) target = $region56
        $region55: #{tpu_custom_call.1} parent=47 // pred_region
          %s556 = sand.u32 %s193, 1
          %s557 = scalar_lea.sflag [#allocation5], %s556
          %s558 = sand.u32 %s193, 1
          %s559 = smul.addr %s558, 8
          %s560 = scalar_lea.vmem [#allocation4], %s559
          %561 = dma.done %s557, 128
        $region56: #{tpu_custom_call.1} parent=47 // pred_fallthru
          _
      $region48: #{tpu_custom_call.1} parent=5 // pred_fallthru
        _
    $region6: #{tpu_custom_call.1} parent=1 // loop_footer
      %s22 = sadd.s32 1, %s18
    $region7: #{tpu_custom_call.1} parent=1 // loop_footer_branch
      %17 = sbr.rel target = $region3
    $region8: #{tpu_custom_call.1} parent=1 // loop_exit
      _
    %562 = vsyncpa [#allocation3], 1
    %s563 = scalar_lea.sflag [#allocation3], 1
    %564 = vsyncpa %s563, 1
    %565 = vsyncpa [#allocation5], 1
    %s566 = scalar_lea.sflag [#allocation5], 1
    %567 = vsyncpa %s566, 1

</llo_original>
